<compile_context>
chip_gen: v7x
topology: tpu7x:2x2x1
jax: 0.10.0
libtpu: 0.0.40
codegen_flags: <defaults>
</compile_context>

<pallas_src>
import jax
import jax.numpy as jnp
from jax.experimental import pallas as pl
from jax.experimental.pallas import tpu as pltpu


_SUBLANES = 8  # vreg sublane count


def _device_kind() -> str:
    try:
        return jax.devices()[0].device_kind.lower()
    except Exception:
        return ""


def _hw_config():
    """Returns (num_cores, tile_cap_bytes, vmem_limit_bytes, core_parallel)."""
    kind = _device_kind()
    if "v7" in kind:
        # 2 TensorCores/chip, 64 MiB physical VMEM (32 MiB scoped default):
        # keep per-input tiles <= ~4 MiB so 2 inputs x 2 pipeline buffers fit;
        # shard the leading grid axis across both TCs with CORE_PARALLEL.
        return 2, 4 * 1024 * 1024, None, True
    if "v5" in kind or "v6" in kind:
        # Single TensorCore, 128 MiB physical VMEM: bigger tiles + raised
        # scoped-VMEM limit amortize per-step overhead further.
        return 1, 8 * 1024 * 1024, 64 * 1024 * 1024, False
    # Unknown / other generations: conservative defaults.
    return 1, 4 * 1024 * 1024, None, False


def _lane_dense_cols(total):
    for c in (2048, 1024, 512, 384, 256, 128):
        if total % c == 0:
            return c
    return None


def _make_loss_kernel(rows, row_tile, tiles_per_core, cols):
    def loss_kernel(x_ref, y_ref, o_ref):
        c = pl.program_id(0)   # core-split axis (CORE_PARALLEL on v7x, size 1 otherwise)
        i = pl.program_id(1)   # row-tile axis ("arbitrary" -> resident accumulator)

        # Logical (unclamped) global row offset of this tile -- used for masking.
        # (The input index_map clamps the DMA to a valid block; the ragged tail
        #  and any duplicated out-of-range logical tile are masked here -> 0.)
        row_start = (c * tiles_per_core + i) * row_tile
        row_ids = row_start + jax.lax.broadcasted_iota(jnp.int32, (row_tile, 1), 0)
        valid = row_ids < rows                       # (row_tile, 1), broadcasts over cols

        x = x_ref[...].astype(jnp.float32)
        y = y_ref[...].astype(jnp.float32)
        # Mask BEFORE log (load-bearing): out-of-range rows hold undefined VMEM
        # data; forcing them to 1.0 makes their contribution exactly log(1)=0.
        x = jnp.where(valid, x, 1.0)
        y = jnp.where(valid, y, 1.0)
        vals = jnp.abs(jnp.log(y) - jnp.log(x))      # (row_tile, cols)

        # Vector partial sum: pure VPU adds, no per-step cross-lane reduce.
        partial = vals.reshape(row_tile // _SUBLANES, _SUBLANES, cols).sum(axis=0)

        @pl.when(i == 0)
        def _():
            o_ref[...] = jnp.zeros_like(o_ref)

        o_ref[...] += partial[None]

    return loss_kernel


def log_stft_magnitude_loss(x_mag, y_mag):
    """Pallas equivalent of LogSTFTMagnitudeLoss.forward(x_mag, y_mag)."""
    assert x_mag.shape == y_mag.shape
    B, frames, freq = x_mag.shape
    rows = B * frames
    total = rows * freq

    ncores, tile_cap_bytes, vmem_limit, core_parallel = _hw_config()

    # ---- lane-dense presentation (contiguous reshape only; no extra HBM traffic) ----
    if freq % 128 == 0:
        r, cols = rows, freq
    else:
        c = _lane_dense_cols(total)
        if c is not None:
            r, cols = total // c, c
        else:
            # Fallback: freq stays on the lane axis (full-dim last block). Works
            # for any freq but wastes vreg lanes when freq % 128 != 0.
            r, cols = rows, freq
    x2 = x_mag.reshape(r, cols)
    y2 = y_mag.reshape(r, cols)

    # ---- tile sizing from the VMEM byte budget (not a fixed row count) ----
    bytes_per_row = cols * x2.dtype.itemsize
    max_rows_by_vmem = max(
        _SUBLANES, (tile_cap_bytes // bytes_per_row) // _SUBLANES * _SUBLANES)
    rows_rounded = pl.cdiv(r, _SUBLANES) * _SUBLANES
    rt = max(_SUBLANES, min(max_rows_by_vmem, rows_rounded))

    num_tiles = pl.cdiv(r, rt)
    tiles_per_core = pl.cdiv(num_tiles, ncores)
    last_tile = num_tiles - 1

    def in_index_map(c, i):
        # Clamp so no DMA block is fully out of bounds; the kernel masks by the
        # logical row offset so a clamped (duplicated) tile contributes 0.
        return (jnp.minimum(c * tiles_per_core + i, last_tile), 0)

    kernel = _make_loss_kernel(r, rt, tiles_per_core, cols)

    if core_parallel and ncores > 1:
        dim_sems = (pltpu.CORE_PARALLEL, pltpu.ARBITRARY)
    else:
        dim_sems = ("arbitrary", "arbitrary")
    cp_kwargs = dict(dimension_semantics=dim_sems)
    if vmem_limit is not None:
        cp_kwargs["vmem_limit_bytes"] = vmem_limit

    in_bytes = total * (x2.dtype.itemsize + y2.dtype.itemsize)
    cost = pl.CostEstimate(
        flops=4 * total,
        transcendentals=2 * total,
        bytes_accessed=in_bytes + ncores * _SUBLANES * cols * 4,
    )

    partials = pl.pallas_call(
        kernel,
        out_shape=jax.ShapeDtypeStruct((ncores, _SUBLANES, cols), jnp.float32),
        grid_spec=pltpu.PrefetchScalarGridSpec(
            num_scalar_prefetch=0,
            grid=(ncores, tiles_per_core),
            in_specs=[
                pl.BlockSpec((rt, cols), in_index_map),
                pl.BlockSpec((rt, cols), in_index_map),
            ],
            out_specs=pl.BlockSpec((1, _SUBLANES, cols), lambda c, i: (c, 0, 0)),
        ),
        compiler_params=pltpu.CompilerParams(**cp_kwargs),
        cost_estimate=cost,
    )(x2, y2)

    return jnp.sum(partials) / total


if __name__ == "__main__":
    key = jax.random.PRNGKey(0)

    def ref_loss(x_mag, y_mag):
        return jnp.mean(jnp.abs(jnp.log(y_mag) - jnp.log(x_mag)))

    def run_case(k, shape):
        k1, k2 = jax.random.split(k)
        # magnitudes must be positive for log()
        x_mag = jax.random.uniform(k1, shape, jnp.float32, minval=0.1, maxval=4.0)
        y_mag = jax.random.uniform(k2, shape, jnp.float32, minval=0.1, maxval=4.0)
        loss = log_stft_magnitude_loss(x_mag, y_mag)
        jax.block_until_ready(loss)
        ref = ref_loss(x_mag, y_mag)
        assert jnp.allclose(loss, ref, rtol=1e-5, atol=1e-6), (shape, loss, ref)

    keys = jax.random.split(key, 3)
    # (B, #frames, #freq_bins)
    run_case(keys[0], (2, 16, 128))   # freq % 128 == 0: dense row layout
    run_case(keys[1], (2, 13, 128))   # ragged rows: exercises the tail mask
    run_case(keys[2], (2, 16, 260))   # freq % 128 != 0: lane-dense flat layout

    print("KERNEL_OK")
</pallas_src>

<mosaic_0001>
module attributes {stable_mosaic.version = 11 : i64} {
  func.func @loss_kernel(%arg0: i32, %arg1: i32, %arg2: memref<32x128xf32, #tpu.memory_space<vmem>>, %arg3: memref<32x128xf32, #tpu.memory_space<vmem>>, %arg4: memref<1x8x128xf32, #tpu.memory_space<vmem>>) attributes {dimension_semantics = [#tpu.dimension_semantics<arbitrary>, #tpu.dimension_semantics<arbitrary>], iteration_bounds = array<i64: 1, 1>, scalar_prefetch = 0 : i64, scratch_operands = 0 : i64, tpu.core_type = #tpu.core_type<tc>, window_params = [{transform_indices = @transform_0, window_bounds = array<i64: 32, 128>}, {transform_indices = @transform_1, window_bounds = array<i64: 32, 128>}, {transform_indices = @transform_2, window_bounds = array<i64: 1, 8, 128>}]} {
    %c1_i32 = arith.constant 1 : i32
    %0 = arith.muli %arg0, %c1_i32 : i32
    %1 = arith.addi %0, %arg1 : i32
    %c32_i32 = arith.constant 32 : i32
    %2 = arith.muli %1, %c32_i32 : i32
    %3 = tpu.iota {dimensions = array<i32: 0>} : vector<32x1xi32>
    %4 = vector.broadcast %2 : i32 to vector<32x1xi32>
    %5 = arith.addi %4, %3 : vector<32x1xi32>
    %c32_i32_0 = arith.constant 32 : i32
    %6 = vector.broadcast %c32_i32_0 : i32 to vector<32x1xi32>
    %7 = arith.cmpi slt, %5, %6 : vector<32x1xi32>
    %c0 = arith.constant 0 : index
    %c0_1 = arith.constant 0 : index
    %8 = vector.load %arg2[%c0, %c0_1] : memref<32x128xf32, #tpu.memory_space<vmem>>, vector<32x128xf32>
    %c0_2 = arith.constant 0 : index
    %c0_3 = arith.constant 0 : index
    %9 = vector.load %arg3[%c0_2, %c0_3] : memref<32x128xf32, #tpu.memory_space<vmem>>, vector<32x128xf32>
    %cst = arith.constant 1.000000e+00 : f32
    %10 = vector.shape_cast %7 : vector<32x1xi1> to vector<32x1xi1>
    %11 = vector.broadcast %10 : vector<32x1xi1> to vector<32x128xi1>
    %12 = vector.broadcast %cst : f32 to vector<32x128xf32>
    %13 = arith.select %11, %8, %12 : vector<32x128xi1>, vector<32x128xf32>
    %cst_4 = arith.constant 1.000000e+00 : f32
    %14 = vector.shape_cast %7 : vector<32x1xi1> to vector<32x1xi1>
    %15 = vector.broadcast %14 : vector<32x1xi1> to vector<32x128xi1>
    %16 = vector.broadcast %cst_4 : f32 to vector<32x128xf32>
    %17 = arith.select %15, %9, %16 : vector<32x128xi1>, vector<32x128xf32>
    %18 = math.log %17 : vector<32x128xf32>
    %19 = math.log %13 : vector<32x128xf32>
    %20 = arith.subf %18, %19 : vector<32x128xf32>
    %21 = math.absf %20 : vector<32x128xf32>
    %22 = vector.shape_cast %21 : vector<32x128xf32> to vector<4x8x128xf32>
    %cst_5 = arith.constant dense<0.000000e+00> : vector<8x128xf32>
    %23 = vector.multi_reduction <add>, %22, %cst_5 [0] : vector<4x8x128xf32> to vector<8x128xf32>
    %c0_i32 = arith.constant 0 : i32
    %24 = arith.cmpi eq, %arg1, %c0_i32 : i32
    %25 = arith.extui %24 : i1 to i32
    %c0_i32_6 = arith.constant 0 : i32
    %26 = arith.cmpi ne, %25, %c0_i32_6 : i32
    scf.if %26 {
      %cst_13 = arith.constant 0.000000e+00 : f32
      %31 = vector.broadcast %cst_13 : f32 to vector<1x8x128xf32>
      %c0_14 = arith.constant 0 : index
      %c0_15 = arith.constant 0 : index
      %c0_16 = arith.constant 0 : index
      %32 = vector.load %arg4[%c0_14, %c0_15, %c0_16] : memref<1x8x128xf32, #tpu.memory_space<vmem>>, vector<1x8x128xf32>
      tpu.vector_store %arg4[%c0_14, %c0_15, %c0_16], %31 {strides = array<i32>} : memref<1x8x128xf32, #tpu.memory_space<vmem>>, vector<1x8x128xf32>,
    } else {
    }
    %c0_7 = arith.constant 0 : index
    %c0_8 = arith.constant 0 : index
    %c0_9 = arith.constant 0 : index
    %27 = vector.load %arg4[%c0_7, %c0_8, %c0_9] : memref<1x8x128xf32, #tpu.memory_space<vmem>>, vector<1x8x128xf32>
    %28 = vector.shape_cast %23 : vector<8x128xf32> to vector<1x8x128xf32>
    %29 = arith.addf %27, %28 : vector<1x8x128xf32>
    %c0_10 = arith.constant 0 : index
    %c0_11 = arith.constant 0 : index
    %c0_12 = arith.constant 0 : index
    %30 = vector.load %arg4[%c0_10, %c0_11, %c0_12] : memref<1x8x128xf32, #tpu.memory_space<vmem>>, vector<1x8x128xf32>
    tpu.vector_store %arg4[%c0_10, %c0_11, %c0_12], %29 {strides = array<i32>} : memref<1x8x128xf32, #tpu.memory_space<vmem>>, vector<1x8x128xf32>,
    return
  }
  func.func @transform_0(%arg0: i32, %arg1: i32) -> (i32, i32) {
    %c1_i32 = arith.constant 1 : i32
    %0 = arith.muli %arg0, %c1_i32 : i32
    %1 = arith.addi %0, %arg1 : i32
    %c0_i32 = arith.constant 0 : i32
    %2 = arith.minsi %1, %c0_i32 : i32
    %c0_i32_0 = arith.constant 0 : i32
    %c0_i32_1 = arith.constant 0 : i32
    return %2, %c0_i32_0 : i32, i32
  }
  func.func @transform_1(%arg0: i32, %arg1: i32) -> (i32, i32) {
    %c1_i32 = arith.constant 1 : i32
    %0 = arith.muli %arg0, %c1_i32 : i32
    %1 = arith.addi %0, %arg1 : i32
    %c0_i32 = arith.constant 0 : i32
    %2 = arith.minsi %1, %c0_i32 : i32
    %c0_i32_0 = arith.constant 0 : i32
    %c0_i32_1 = arith.constant 0 : i32
    return %2, %c0_i32_0 : i32, i32
  }
  func.func @transform_2(%arg0: i32, %arg1: i32) -> (i32, i32, i32) {
    %c0_i32 = arith.constant 0 : i32
    %c0_i32_0 = arith.constant 0 : i32
    %c0_i32_1 = arith.constant 0 : i32
    return %arg0, %c0_i32, %c0_i32_0 : i32, i32, i32
  }
}

</mosaic_0001>

<llo_original>
// kernel: tpu_custom_call.1
$region0: #{tpu_custom_call.1}
  #allocation0 [shape = 'u32[]', space=smem, size = 0x4, offset = 0x4, fixed_abs, tag = 'smem constant byte address 0x4 - core index']
  #allocation1 [shape = 'u32[144,128]{1,0:T(1,128)}', space=vmem, size = 0x12000, scoped, tag = 'internal scratch']
  %s0 = inlined_call_operand.hbm [shape: f32[32,128], index: 0, kind: input, shape index: {}]
  %s1 = inlined_call_operand.hbm [shape: f32[32,128], index: 1, kind: input, shape index: {}]
  %s2 = inlined_call_operand.hbm [shape: f32[1,8,128], index: 2, kind: output, shape index: {}]
  %s3 = sld [smem:[#allocation0]]
  $region30: #{tpu_custom_call.1} parent=0
    _
  %s5 = ssub.s32 1, %s3
  %s6 = scalar_select 0, %s5, %s3
  $region1: #{tpu_custom_call.1} parent=0
    #allocation2 [shape = 'u8[16384]{0}', space=vmem, size = 0x4000, scoped, tag = 'input window, operand 0, single buffered']
    #allocation3 [shape = 's32[1]{0}', space=sflag, size = 0x4, scoped, tag = 'scoped memory for tpu_custom_call.1']
    #allocation4 [shape = 's32[1]{0}', space=sflag, size = 0x4, scoped, tag = 'scoped memory for tpu_custom_call.1']
    #allocation5 [shape = 'u8[16384]{0}', space=vmem, size = 0x4000, scoped, tag = 'input window, operand 1, single buffered']
    #allocation6 [shape = 's32[1]{0}', space=sflag, size = 0x4, scoped, tag = 'scoped memory for tpu_custom_call.1']
    #allocation7 [shape = 'u8[4096]{0}', space=vmem, size = 0x1000, scoped, tag = 'output window, operand 0, single buffered']
    %7 = vsyncpa [#allocation3], 0
    %8 = vsyncpa [#allocation6], 0
    %9 = vsyncpa [#allocation4], 0
    // Predicated region
    $region2: #{tpu_custom_call.1} parent=1 // pred_check
      _
    $region3: #{tpu_custom_call.1} parent=1 // pred_check_branch
      %11 = sbr.rel (0) target = $region5
    $region4: #{tpu_custom_call.1} parent=1 // pred_region
      %s12 = sadd.s32 0, 0
      %p13 = scmp.lt.s32.totalorder %s12, 0
      %s14 = scalar_select %p13, %s12, 0
      %s15 = smul.u32 4, %s14
      %s17 = ssub.s32 512, 512
      %18 = vsyncadd [#allocation3], %s17
      %s19 = smul.addr %s15, 128
      %s20 = scalar_lea.hbm %s0, %s19
      %s21 = sshll.u32 [#allocation2], 4
      %s22 = int_to_ptr.vmem [resolvable:$true] %s21
      %27 = dma.hbm_to_vmem [thread:$0]  %s20, 512, %s22, [#allocation3], 128, 128, 8
    $region5: #{tpu_custom_call.1} parent=1 // pred_fallthru
      _
    // Predicated region
    $region6: #{tpu_custom_call.1} parent=1 // pred_check
      _
    $region7: #{tpu_custom_call.1} parent=1 // pred_check_branch
      %29 = sbr.rel (0) target = $region9
    $region8: #{tpu_custom_call.1} parent=1 // pred_region
      %s30 = sadd.s32 0, 0
      %p31 = scmp.lt.s32.totalorder %s30, 0
      %s32 = scalar_select %p31, %s30, 0
      %s33 = smul.u32 4, %s32
      %s35 = ssub.s32 512, 512
      %36 = vsyncadd [#allocation6], %s35
      %s37 = smul.addr %s33, 128
      %s38 = scalar_lea.hbm %s1, %s37
      %s39 = sshll.u32 [#allocation5], 4
      %s40 = int_to_ptr.vmem [resolvable:$true] %s39
      %45 = dma.hbm_to_vmem [thread:$0]  %s38, 512, %s40, [#allocation6], 128, 128, 8
    $region9: #{tpu_custom_call.1} parent=1 // pred_fallthru
      _
    // Predicated region
    $region10: #{tpu_custom_call.1} parent=1 // pred_check
      _
    $region11: #{tpu_custom_call.1} parent=1 // pred_check_branch
      %47 = sbr.rel (0) target = $region13
    $region12: #{tpu_custom_call.1} parent=1 // pred_region
      %48 = dma.done [#allocation3], 512
    $region13: #{tpu_custom_call.1} parent=1 // pred_fallthru
      _
    // Predicated region
    $region14: #{tpu_custom_call.1} parent=1 // pred_check
      _
    $region15: #{tpu_custom_call.1} parent=1 // pred_check_branch
      %50 = sbr.rel (0) target = $region17
    $region16: #{tpu_custom_call.1} parent=1 // pred_region
      %51 = dma.done [#allocation6], 512
    $region17: #{tpu_custom_call.1} parent=1 // pred_fallthru
      _
    %s52 = sadd.s32 0, 0
    %p53 = scmp.lt.s32.totalorder %s52, 0
    %s54 = scalar_select %p53, %s52, 0
    %s55 = smul.u32 4, %s54
    %s56 = sadd.s32 0, 0
    %p57 = scmp.lt.s32.totalorder %s56, 0
    %s58 = scalar_select %p57, %s56, 0
    %s59 = smul.u32 4, %s58
    %s60 = sadd.s32 0, 0
    %s61 = smul.u32 %s60, 32
    %v62 = vlaneseq
    %v63 = vshrl.u32 %v62, 7
    %v64 = vadd.s32 %v63, 8
    %v65 = vadd.s32 %v63, 16
    %v66 = vadd.s32 %v63, 24
    %v67 = vstv %s61
    %v68 = vadd.s32 %v67, %v63
    %v69 = vadd.s32 %v67, %v64
    %v70 = vadd.s32 %v67, %v65
    %v71 = vadd.s32 %v67, %v66
    %vm72 = vcmp.lt.s32.totalorder %v68, 32
    %vm73 = vcmp.lt.s32.totalorder %v69, 32
    %vm74 = vcmp.lt.s32.totalorder %v70, 32
    %vm75 = vcmp.lt.s32.totalorder %v71, 32
    %v76 = vld [vmem:[#allocation2] sm:$0xff]
    %v77 = vld [vmem:[#allocation2 + $0x8] sm:$0xff]
    %v78 = vld [vmem:[#allocation2 + $0x10] sm:$0xff]
    %v79 = vld [vmem:[#allocation2 + $0x18] sm:$0xff]
    %v80 = vld [vmem:[#allocation5] sm:$0xff]
    %v81 = vld [vmem:[#allocation5 + $0x8] sm:$0xff]
    %v82 = vld [vmem:[#allocation5 + $0x10] sm:$0xff]
    %v83 = vld [vmem:[#allocation5 + $0x18] sm:$0xff]
    %v84 = vsel %vm72, 1, 0
    %v85 = vsel %vm73, 1, 0
    %v86 = vsel %vm74, 1, 0
    %v87 = vsel %vm75, 1, 0
    %vm88 = vcmp.eq.s32.totalorder %v84, 1
    %vm89 = vcmp.eq.s32.totalorder %v85, 1
    %vm90 = vcmp.eq.s32.totalorder %v86, 1
    %vm91 = vcmp.eq.s32.totalorder %v87, 1
    %v92 = vsel %vm88, %v76, 1.0
    %v93 = vsel %vm89, %v77, 1.0
    %v94 = vsel %vm90, %v78, 1.0
    %v95 = vsel %vm91, %v79, 1.0
    %v96 = vsel %vm88, %v80, 1.0
    %v97 = vsel %vm89, %v81, 1.0
    %v98 = vsel %vm90, %v82, 1.0
    %v99 = vsel %vm91, %v83, 1.0
    %v100 = vlog2.pop %v96
    %v101 = vmul.f32 %v100, 0.6931472
    %v102 = vlog2.pop %v97
    %v103 = vmul.f32 %v102, 0.6931472
    %v104 = vlog2.pop %v98
    %v105 = vmul.f32 %v104, 0.6931472
    %v106 = vlog2.pop %v99
    %v107 = vmul.f32 %v106, 0.6931472
    %v108 = vlog2.pop %v92
    %v109 = vmul.f32 %v108, 0.6931472
    %v110 = vlog2.pop %v93
    %v111 = vmul.f32 %v110, 0.6931472
    %v112 = vlog2.pop %v94
    %v113 = vmul.f32 %v112, 0.6931472
    %v114 = vlog2.pop %v95
    %v115 = vmul.f32 %v114, 0.6931472
    %v116 = vsub.f32 %v101, %v109
    %v117 = vsub.f32 %v103, %v111
    %v118 = vsub.f32 %v105, %v113
    %v119 = vsub.f32 %v107, %v115
    %v120 = vand.u32 2147483647, %v116
    %v121 = vand.u32 2147483647, %v117
    %v122 = vand.u32 2147483647, %v118
    %v123 = vand.u32 2147483647, %v119
    %v124 = vadd.f32 %v120, %v121
    %v125 = vadd.f32 %v124, %v122
    %v126 = vadd.f32 %v125, %v123
    %p127 = scmp.eq.s32.totalorder 0, 0
    // Predicated region
    $region18: #{tpu_custom_call.1} parent=1 // pred_check
      %p128 = pneg %p127
    $region19: #{tpu_custom_call.1} parent=1 // pred_check_branch
      %130 = sbr.rel (%p128) target = $region21
    $region20: #{tpu_custom_call.1} parent=1 // pred_region
      %131 = vst [vmem:[#allocation7] sm:$0xff] 0.0
    $region21: #{tpu_custom_call.1} parent=1 // pred_fallthru
      _
    %v132 = vld [vmem:[#allocation7] sm:$0xff]
    %v133 = vadd.f32 %v132, %v126
    %134 = vst [vmem:[#allocation7] sm:$0xff] %v133
    // Predicated region
    $region22: #{tpu_custom_call.1} parent=1 // pred_check
      _
    $region23: #{tpu_custom_call.1} parent=1 // pred_check_branch
      %136 = sbr.rel (0) target = $region25
    $region24: #{tpu_custom_call.1} parent=1 // pred_region
      %s138 = ssub.s32 128, 128
      %139 = vsyncadd [#allocation4], %s138
      %s141 = sshll.u32 [#allocation7], 4
      %s142 = int_to_ptr.vmem [resolvable:$true] %s141
      %144 = dma.vmem_to_hbm [thread:$0]  %s142, 128, %s2, [#allocation4]
    $region25: #{tpu_custom_call.1} parent=1 // pred_fallthru
      _
    // Predicated region
    $region26: #{tpu_custom_call.1} parent=1 // pred_check
      _
    $region27: #{tpu_custom_call.1} parent=1 // pred_check_branch
      %146 = sbr.rel (0) target = $region29
    $region28: #{tpu_custom_call.1} parent=1 // pred_region
      %147 = dma.done [#allocation4], 128
    $region29: #{tpu_custom_call.1} parent=1 // pred_fallthru
      _
    %148 = vsyncpa [#allocation3], 1
    %149 = vsyncpa [#allocation6], 1
    %150 = vsyncpa [#allocation4], 1

</llo_original>
